<compile_context>
chip_gen: v7x
topology: tpu7x:2x2x1
jax: 0.10.0
libtpu: 0.0.40
codegen_flags: <defaults>
</compile_context>

<pallas_src>
import math

import jax
import jax.numpy as jnp
from jax.experimental import pallas as pl
from jax.experimental.pallas import tpu as pltpu


def _copy_kernel(x_ref, o_ref):
    # Pure lane-dense identity copy of one (tb, tf) tile.
    o_ref[...] = x_ref[...]


def _vmem_capacity_bytes() -> int:
    """Physical VMEM per TensorCore; conservative fallback if query fails."""
    try:
        cap = int(getattr(pltpu.get_tpu_info(), "vmem_capacity_bytes"))
        if cap > 0:
            return cap
    except Exception:
        pass
    return 64 << 20  # v7x-sized conservative default


# Minimum sublane multiple per element width (f32 -> 8, bf16 -> 16, int8 -> 32).
_SUBLANE = {4: 8, 2: 16, 1: 32}


def _pick_tiles(B: int, flat: int, itemsize: int, budget_bytes: int):
    """Pick (tb, tf) so 4 live tiles (double-buffered in + out) fit the budget."""
    sub = _SUBLANE.get(itemsize, 8)
    # 4 live VMEM buffers: double-buffered input tile + double-buffered output tile.
    per_tile = max(budget_bytes // 4, 128 * sub * itemsize)
    # Multi-MiB tiles amortize the ~0.35us per-grid-step overhead; capping at a
    # few MiB keeps VMEM headroom and yields >=2 pipelined steps on large inputs.
    target = min(per_tile, 4 << 20)

    # Lane (flat) axis: full extent if a minimal-sublane strip fits the target,
    # otherwise the largest multiple of 128 that does.
    if flat <= 128 or flat * sub * itemsize <= target:
        tf = flat
    else:
        tf = (target // (sub * itemsize) // 128) * 128
        tf = max(128, min(tf, (flat // 128) * 128))

    # Sublane (batch) axis: largest count whose (tb, tf) tile fits the target.
    max_tb = max(1, target // (tf * itemsize))
    if B <= max_tb:
        tb = B  # full-dim block: any extent is a legal block dim
    else:
        tb = max(sub, (max_tb // sub) * sub)  # never exceeds target (max_tb >= sub)
    return tb, tf


def _flatten_copy(x2: jax.Array, *, alias_into_input: bool) -> jax.Array:
    """Tiled, pipelined Pallas identity copy of an already-flat (B, flat) array."""
    B, flat = x2.shape
    itemsize = jnp.dtype(x2.dtype).itemsize

    cap = _vmem_capacity_bytes()
    budget = max(8 << 20, cap // 4)                 # live-tile budget
    vmem_limit = int(min(cap // 2, 2 * budget))     # tell the compiler (>= usage)

    tb, tf = _pick_tiles(B, flat, itemsize, budget)
    grid = (pl.cdiv(B, tb), pl.cdiv(flat, tf))

    return pl.pallas_call(
        _copy_kernel,
        out_shape=jax.ShapeDtypeStruct((B, flat), x2.dtype),
        grid=grid,
        in_specs=[pl.BlockSpec((tb, tf), lambda i, j: (i, j))],
        out_specs=pl.BlockSpec((tb, tf), lambda i, j: (i, j)),
        input_output_aliases=({0: 0} if alias_into_input else {}),
        compiler_params=pltpu.CompilerParams(
            dimension_semantics=("parallel", "parallel"),
            vmem_limit_bytes=vmem_limit,
        ),
        cost_estimate=pl.CostEstimate(
            flops=0,
            transcendentals=0,
            bytes_accessed=2 * B * flat * itemsize,
        ),
    )(x2)


def flatten_layer(x: jax.Array, *, use_kernel: bool = False,
                  alias_into_input: bool = False) -> jax.Array:
    """Equivalent of FlattenLayer.forward: x.view(x.shape[0], -1).

    Default (use_kernel=False): zero-cost metadata reshape — the right answer
    for a standalone flatten. use_kernel=True runs the tiled Pallas copy
    (for fusion into a larger Pallas pipeline / per the assignment).
    """
    B = x.shape[0]
    flat = math.prod(x.shape[1:]) if x.ndim > 1 else 1
    x2 = jnp.reshape(x, (B, flat))  # row-major reshape == torch .view(B, -1)
    if not use_kernel:
        return x2
    return _flatten_copy(x2, alias_into_input=alias_into_input)


if __name__ == "__main__":
    key = jax.random.PRNGKey(0)
    # NCHW input, small shapes: batch=2, channels=4, spatial=16x16
    x = jax.random.normal(key, (2, 4, 16, 16), dtype=jnp.float32)
    ref = jnp.reshape(x, (x.shape[0], -1))

    # 1) Default standalone path: metadata-only reshape, no kernel launched.
    out_fast = jax.block_until_ready(flatten_layer(x))

    # 2) Pallas copy-kernel path (fresh output buffer).
    out_kernel = jax.block_until_ready(
        jax.jit(lambda a: flatten_layer(a, use_kernel=True))(x))

    # 3) Pallas copy-kernel path aliased into the input buffer (no 2nd HBM alloc).
    out_alias = jax.block_until_ready(
        jax.jit(lambda a: flatten_layer(a, use_kernel=True,
                                        alias_into_input=True))(x))

    for out in (out_fast, out_kernel, out_alias):
        assert out.shape == (2, 4 * 16 * 16), out.shape
        assert out.dtype == x.dtype
        assert jnp.array_equal(out, ref)

    print("KERNEL_OK")
</pallas_src>

<mosaic_0001>
module attributes {stable_mosaic.version = 11 : i64} {
  func.func @_copy_kernel(%arg0: i32, %arg1: i32, %arg2: memref<2x1024xf32, #tpu.memory_space<vmem>>, %arg3: memref<2x1024xf32, #tpu.memory_space<vmem>>) attributes {dimension_semantics = [#tpu.dimension_semantics<parallel>, #tpu.dimension_semantics<parallel>], iteration_bounds = array<i64: 1, 1>, scalar_prefetch = 0 : i64, scratch_operands = 0 : i64, tpu.core_type = #tpu.core_type<tc>, window_params = [{transform_indices = @transform_0, window_bounds = array<i64: 2, 1024>}, {transform_indices = @transform_1, window_bounds = array<i64: 2, 1024>}]} {
    %c0 = arith.constant 0 : index
    %c0_0 = arith.constant 0 : index
    %0 = vector.load %arg2[%c0, %c0_0] : memref<2x1024xf32, #tpu.memory_space<vmem>>, vector<2x1024xf32>
    %c0_1 = arith.constant 0 : index
    %c0_2 = arith.constant 0 : index
    %1 = vector.load %arg3[%c0_1, %c0_2] : memref<2x1024xf32, #tpu.memory_space<vmem>>, vector<2x1024xf32>
    tpu.vector_store %arg3[%c0_1, %c0_2], %0 {strides = array<i32>} : memref<2x1024xf32, #tpu.memory_space<vmem>>, vector<2x1024xf32>,
    return
  }
  func.func @transform_0(%arg0: i32, %arg1: i32) -> (i32, i32) {
    %c0_i32 = arith.constant 0 : i32
    return %arg0, %arg1 : i32, i32
  }
  func.func @transform_1(%arg0: i32, %arg1: i32) -> (i32, i32) {
    %c0_i32 = arith.constant 0 : i32
    return %arg0, %arg1 : i32, i32
  }
}

</mosaic_0001>

<llo_original>
// kernel: _lambda_.1
$region0: #{_lambda_.1}
  #allocation0 [shape = 'u32[]', space=smem, size = 0x4, offset = 0x4, fixed_abs, tag = 'smem constant byte address 0x4 - core index']
  #allocation1 [shape = 'u32[144,128]{1,0:T(1,128)}', space=vmem, size = 0x12000, scoped, tag = 'internal scratch']
  %s0 = inlined_call_operand.vmem [shape: f32[2,1024], index: 0, kind: input, shape index: {}]
  %s1 = inlined_call_operand.hbm [shape: f32[2,1024], index: 1, kind: output, shape index: {}]
  %s2 = sld [smem:[#allocation0]]
  $region14: #{_lambda_.1} parent=0
    _
  %s4 = ssub.s32 1, %s2
  %s5 = scalar_select 0, %s4, %s2
  $region1: #{_lambda_.1} parent=0
    #allocation2 [shape = 'u8[8192]{0}', space=vmem, size = 0x2000, scoped, tag = 'output window, operand 0, single buffered']
    #allocation3 [shape = 's32[1]{0}', space=sflag, size = 0x4, scoped, tag = 'scoped memory for _lambda_.1']
    %6 = vsyncpa [#allocation3], 0
    // Predicated region
    $region2: #{_lambda_.1} parent=1 // pred_check
      _
    $region3: #{_lambda_.1} parent=1 // pred_check_branch
      %8 = sbr.rel (0) target = $region5
    $region4: #{_lambda_.1} parent=1 // pred_region
      _
    $region5: #{_lambda_.1} parent=1 // pred_fallthru
      _
    %v9 = vld [vmem:[%s0] sm:$0xff]
    %v10 = vld [vmem:[%s0 + $0x8] sm:$0xff]
    %11 = vst [vmem:[#allocation2] sm:$0xff] %v9
    %12 = vst [vmem:[#allocation2 + $0x8] sm:$0xff] %v10
    // Predicated region
    $region6: #{_lambda_.1} parent=1 // pred_check
      _
    $region7: #{_lambda_.1} parent=1 // pred_check_branch
      %14 = sbr.rel (0) target = $region9
    $region8: #{_lambda_.1} parent=1 // pred_region
      %s16 = ssub.s32 256, 256
      %17 = vsyncadd [#allocation3], %s16
      %s19 = sshll.u32 [#allocation2], 4
      %s20 = int_to_ptr.vmem [resolvable:$true] %s19
      %22 = dma.vmem_to_hbm [thread:$0]  %s20, 256, %s1, [#allocation3]
    $region9: #{_lambda_.1} parent=1 // pred_fallthru
      _
    // Predicated region
    $region10: #{_lambda_.1} parent=1 // pred_check
      _
    $region11: #{_lambda_.1} parent=1 // pred_check_branch
      %24 = sbr.rel (0) target = $region13
    $region12: #{_lambda_.1} parent=1 // pred_region
      %25 = dma.done [#allocation3], 256
    $region13: #{_lambda_.1} parent=1 // pred_fallthru
      _
    %26 = vsyncpa [#allocation3], 1

</llo_original>
